<compile_context>
chip_gen: v6e
topology: v6e:2x2x1
jax: 0.10.0
libtpu: 0.0.40
codegen_flags: <defaults>
</compile_context>

<pallas_src>
import functools

import jax
import jax.numpy as jnp
from jax import lax
from jax.experimental import pallas as pl
from jax.experimental.pallas import tpu as pltpu

_LANE = 128
_SUBLANE = 8
# (2048, 128) f32 block = 1 MiB per input; double-buffered x 2 inputs = 4 MiB.
_DEFAULT_MAX_BLOCK_ROWS = 2048


def _to_tpu_float(x):
    if x.dtype in (jnp.float32, jnp.bfloat16, jnp.float16):
        return x
    return x.astype(jnp.float32)


@functools.partial(jax.jit, static_argnames=("max_block_rows",))
def l1_loss_pallas(a, b, *, max_block_rows=_DEFAULT_MAX_BLOCK_ROWS):
    """Mean absolute error over all elements, computed with a Pallas reduction."""
    assert a.shape == b.shape, "L1Loss requires matching shapes"
    n_elem = a.size

    a = _to_tpu_float(a)
    b = _to_tpu_float(b)
    a_flat = a.reshape(-1)
    b_flat = b.reshape(-1)

    # Pad (only when needed) to a multiple of 8*128 so the flat array reshapes
    # to a lane-dense (rows, 128) slab with rows % 8 == 0.  Padded entries are
    # zero in both operands -> contribute |0 - 0| = 0 to the sum.
    chunk = _SUBLANE * _LANE
    pad = (-n_elem) % chunk
    if pad:
        a_flat = jnp.pad(a_flat, (0, pad))
        b_flat = jnp.pad(b_flat, (0, pad))

    rows = (n_elem + pad) // _LANE
    a2 = a_flat.reshape(rows, _LANE)
    b2 = b_flat.reshape(rows, _LANE)

    block_rows = min(max_block_rows, rows)          # full-extent block if small
    num_blocks = -(-rows // block_rows)             # ceil div, Python int
    need_mask = (rows % block_rows) != 0            # ragged last block?

    def kernel(a_ref, b_ref, out_ref):
        diff = jnp.abs(a_ref[...].astype(jnp.float32)
                       - b_ref[...].astype(jnp.float32))
        if need_mask:
            base = pl.program_id(0) * block_rows
            rid = base + lax.broadcasted_iota(jnp.int32, diff.shape, 0)
            diff = jnp.where(rid < rows, diff, 0.0)
        # Per-block partial sum reduced along rows -> lane-dense (1, 128) store.
        out_ref[...] = jnp.sum(diff, axis=0, keepdims=True)

    partials = pl.pallas_call(
        kernel,
        out_shape=jax.ShapeDtypeStruct((num_blocks, _LANE), jnp.float32),
        grid=(num_blocks,),
        in_specs=[
            pl.BlockSpec((block_rows, _LANE), lambda i: (i, 0)),
            pl.BlockSpec((block_rows, _LANE), lambda i: (i, 0)),
        ],
        out_specs=pl.BlockSpec((1, _LANE), lambda i: (i, 0)),
        compiler_params=pltpu.CompilerParams(
            dimension_semantics=("parallel",)),   # independent partial sums
    )(a2, b2)

    return jnp.sum(partials) / jnp.float32(n_elem)


class Loss:
    """JAX/Pallas port of the PyTorch `Loss` module forward pass.

    Only forward() semantics are ported.  The auxiliary submodules created in
    the PyTorch __init__ (tv_loss, color_loss, space_loss, exp_loss,
    contrast_loss, gaussian filter, VGG16 loss_network) are never touched by
    the 'l1' or default branches of forward(), so no parameters are needed.
    """

    def __init__(self, loss_type="l2_kl_per", cfg=None):   # default matches PyTorch
        self.loss_type = loss_type
        self.cfg = cfg

    def __call__(self, input, GT):
        if self.loss_type == "l1":
            l1 = l1_loss_pallas(input["img_enhance"], GT["img_org"])
            loss = l1
            return loss, l1
        elif self.loss_type == "rec_tex_vis":
            # TODO(synk): requires pretrained VGG16 perceptual features + MS-SSIM; not ported.
            raise NotImplementedError("'rec_tex_vis' branch is not ported")
        return 0.0


if __name__ == "__main__":
    key = jax.random.PRNGKey(0)
    k1, k2, k3, k4, k5, k6 = jax.random.split(key, 6)

    # --- 1) Loss module, 'l1' branch, small NCHW image pair (f32) ------------
    B, C, H, W = 2, 3, 16, 16
    img_enhance = jax.random.uniform(k1, (B, C, H, W), dtype=jnp.float32)
    img_org = jax.random.uniform(k2, (B, C, H, W), dtype=jnp.float32)

    loss_fn = Loss(loss_type="l1")
    loss, l1 = loss_fn({"img_enhance": img_enhance}, {"img_org": img_org})
    loss = jax.block_until_ready(loss)
    ref = jnp.mean(jnp.abs(img_enhance - img_org))
    assert jnp.allclose(loss, ref, rtol=1e-5, atol=1e-6), (loss, ref)
    assert jnp.allclose(l1, ref, rtol=1e-5, atol=1e-6), (l1, ref)

    # --- 2) Multi-block + ragged-last-block mask path (small block override) -
    out2 = jax.block_until_ready(
        l1_loss_pallas(img_enhance, img_org, max_block_rows=8))
    assert jnp.allclose(out2, ref, rtol=1e-5, atol=1e-6), (out2, ref)

    # --- 3) Non-aligned element count (exercises the tail-pad path) ----------
    x3 = jax.random.uniform(k3, (1, 3, 10, 13), dtype=jnp.float32)
    y3 = jax.random.uniform(k4, (1, 3, 10, 13), dtype=jnp.float32)
    out3 = jax.block_until_ready(l1_loss_pallas(x3, y3))
    ref3 = jnp.mean(jnp.abs(x3 - y3))
    assert jnp.allclose(out3, ref3, rtol=1e-5, atol=1e-6), (out3, ref3)

    # --- 4) bf16 inputs streamed natively -----------------------------------
    x4 = jax.random.uniform(k5, (2, 4, 16, 16), dtype=jnp.float32).astype(jnp.bfloat16)
    y4 = jax.random.uniform(k6, (2, 4, 16, 16), dtype=jnp.float32).astype(jnp.bfloat16)
    out4 = jax.block_until_ready(l1_loss_pallas(x4, y4))
    ref4 = jnp.mean(jnp.abs(x4.astype(jnp.float32) - y4.astype(jnp.float32)))
    assert jnp.allclose(out4, ref4, rtol=1e-3, atol=1e-4), (out4, ref4)

    # --- 5) Default ('l2_kl_per') branch returns 0.0, matching PyTorch -------
    default_loss = Loss()({"img_enhance": img_enhance}, {"img_org": img_org})
    assert default_loss == 0.0

    print("KERNEL_OK")
</pallas_src>

<mosaic_0001>
module attributes {stable_mosaic.version = 11 : i64} {
  func.func @kernel(%arg0: i32, %arg1: memref<16x128xf32, #tpu.memory_space<vmem>>, %arg2: memref<16x128xf32, #tpu.memory_space<vmem>>, %arg3: memref<1x128xf32, #tpu.memory_space<vmem>>) attributes {dimension_semantics = [#tpu.dimension_semantics<parallel>], iteration_bounds = array<i64: 1>, scalar_prefetch = 0 : i64, scratch_operands = 0 : i64, tpu.core_type = #tpu.core_type<tc>, window_params = [{transform_indices = @transform_0, window_bounds = array<i64: 16, 128>}, {transform_indices = @transform_1, window_bounds = array<i64: 16, 128>}, {transform_indices = @transform_2, window_bounds = array<i64: 1, 128>}]} {
    %c0 = arith.constant 0 : index
    %c0_0 = arith.constant 0 : index
    %0 = vector.load %arg1[%c0, %c0_0] : memref<16x128xf32, #tpu.memory_space<vmem>>, vector<16x128xf32>
    %c0_1 = arith.constant 0 : index
    %c0_2 = arith.constant 0 : index
    %1 = vector.load %arg2[%c0_1, %c0_2] : memref<16x128xf32, #tpu.memory_space<vmem>>, vector<16x128xf32>
    %2 = arith.subf %0, %1 : vector<16x128xf32>
    %3 = math.absf %2 : vector<16x128xf32>
    %cst = arith.constant dense<0.000000e+00> : vector<128xf32>
    %4 = vector.multi_reduction <add>, %3, %cst [0] : vector<16x128xf32> to vector<128xf32>
    %5 = vector.shape_cast %4 : vector<128xf32> to vector<1x128xf32>
    %c0_3 = arith.constant 0 : index
    %c0_4 = arith.constant 0 : index
    %6 = vector.load %arg3[%c0_3, %c0_4] : memref<1x128xf32, #tpu.memory_space<vmem>>, vector<1x128xf32>
    tpu.vector_store %arg3[%c0_3, %c0_4], %5 {strides = array<i32>} : memref<1x128xf32, #tpu.memory_space<vmem>>, vector<1x128xf32>,
    return
  }
  func.func @transform_0(%arg0: i32) -> (i32, i32) {
    %c0_i32 = arith.constant 0 : i32
    %c0_i32_0 = arith.constant 0 : i32
    return %arg0, %c0_i32 : i32, i32
  }
  func.func @transform_1(%arg0: i32) -> (i32, i32) {
    %c0_i32 = arith.constant 0 : i32
    %c0_i32_0 = arith.constant 0 : i32
    return %arg0, %c0_i32 : i32, i32
  }
  func.func @transform_2(%arg0: i32) -> (i32, i32) {
    %c0_i32 = arith.constant 0 : i32
    %c0_i32_0 = arith.constant 0 : i32
    return %arg0, %c0_i32 : i32, i32
  }
}

</mosaic_0001>

<llo_original>
// kernel: l1_loss_pallas.1
$region0: #{l1_loss_pallas.1}
  #allocation0 [shape = 'u32[]', space=smem, size = 0x4, offset = 0x4, fixed_abs, tag = 'smem constant byte address 0x4 - core index']
  #allocation1 [shape = 'u32[144,128]{1,0:T(1,128)}', space=vmem, size = 0x12000, scoped, tag = 'internal scratch']
  %s0 = inlined_call_operand.vmem [shape: f32[16,128], index: 0, kind: input, shape index: {}]
  %s1 = inlined_call_operand.vmem [shape: f32[16,128], index: 1, kind: input, shape index: {}]
  %s2 = inlined_call_operand.vmem [shape: f32[1,128], index: 2, kind: output, shape index: {}]
  %s3 = sld [smem:[#allocation0]]
  $region18: #{l1_loss_pallas.1} parent=0
    _
  %s5 = ssub.s32 1, %s3
  %s6 = scalar_select 0, %s5, %s3
  // Predicated region
  $region2: #{l1_loss_pallas.1} parent=0 // pred_check
    _
  $region3: #{l1_loss_pallas.1} parent=0 // pred_check_branch
    %8 = sbr.rel (0) target = $region5
  $region4: #{l1_loss_pallas.1} parent=0 // pred_region
    _
  $region5: #{l1_loss_pallas.1} parent=0 // pred_fallthru
    _
  // Predicated region
  $region6: #{l1_loss_pallas.1} parent=0 // pred_check
    _
  $region7: #{l1_loss_pallas.1} parent=0 // pred_check_branch
    %10 = sbr.rel (0) target = $region9
  $region8: #{l1_loss_pallas.1} parent=0 // pred_region
    _
  $region9: #{l1_loss_pallas.1} parent=0 // pred_fallthru
    _
  %v11 = vld [vmem:[%s0] sm:$0xff]
  %v12 = vld [vmem:[%s0 + $0x8] sm:$0xff]
  %v13 = vld [vmem:[%s1] sm:$0xff]
  %v14 = vld [vmem:[%s1 + $0x8] sm:$0xff]
  %v15 = vsub.f32 %v11, %v13
  %v16 = vsub.f32 %v12, %v14
  %v17 = vand.u32 2147483647, %v15
  %v18 = vand.u32 2147483647, %v16
  %v19 = vadd.f32 %v17, %v18
  %v20 = vrot.slane %v19, 4
  %v21 = vadd.f32 %v19, %v20
  %v22 = vrot.slane %v21, 2
  %v23 = vadd.f32 %v21, %v22
  %v24 = vrot.slane %v23, 1
  %v25 = vadd.f32 %v23, %v24
  %26 = vst [vmem:[%s2] sm:$0x1] %v25
  // Predicated region
  $region10: #{l1_loss_pallas.1} parent=0 // pred_check
    _
  $region11: #{l1_loss_pallas.1} parent=0 // pred_check_branch
    %28 = sbr.rel (0) target = $region13
  $region12: #{l1_loss_pallas.1} parent=0 // pred_region
    _
  $region13: #{l1_loss_pallas.1} parent=0 // pred_fallthru
    _
  // Predicated region
  $region14: #{l1_loss_pallas.1} parent=0 // pred_check
    _
  $region15: #{l1_loss_pallas.1} parent=0 // pred_check_branch
    %30 = sbr.rel (0) target = $region17
  $region16: #{l1_loss_pallas.1} parent=0 // pred_region
    _
  $region17: #{l1_loss_pallas.1} parent=0 // pred_fallthru
    _

</llo_original>
